<compile_context>
chip_gen: v6e
topology: v6e:2x2x1
jax: 0.10.0
libtpu: 0.0.40
codegen_flags: <defaults>
</compile_context>

<pallas_src>
import functools

import jax
import jax.numpy as jnp
from jax import lax
from jax.experimental import pallas as pl
from jax.experimental.pallas import tpu as pltpu


def _lstm_kernel(x_ref, wih_ref, whh_ref, b_ref, wfc_ref, bfc_ref,
                 out_ref, xg_sc, hs_sc, *, seq_len, batch_pad, hidden_dim):
    T, Bp, H = seq_len, batch_pad, hidden_dim

    # ---- phase 1: batched input projection for every timestep (one MXU op) ----
    # (T*Bp, D)bf16 @ (D, 4H)bf16 -> f32 accum, LSTM biases folded in.
    xg_sc[...] = (
        jnp.dot(x_ref[...].astype(jnp.bfloat16), wih_ref[...],
                preferred_element_type=jnp.float32)
        + b_ref[...]
    )

    # Hoist loop-invariant values: recurrent weights (bf16, 2 vregs at H=32) and
    # the gate-fusion pre/post masks (tanh(x) = 2*sigmoid(2x) - 1 on g lanes).
    whh = whh_ref[...]                                            # (H, 4H) bf16
    lane = lax.broadcasted_iota(jnp.int32, (Bp, 4 * H), 1)
    is_g = jnp.logical_and(lane >= 2 * H, lane < 3 * H)
    pre = jnp.where(is_g, 2.0, 1.0).astype(jnp.float32)           # x2 on g lanes
    post_b = jnp.where(is_g, -1.0, 0.0).astype(jnp.float32)       # -1 on g lanes

    # ---- phase 2: serial recurrence, fully unrolled inside this invocation ----
    def step(t, carry):
        h, c = carry                                              # (Bp, H) f32
        row = pl.multiple_of(t * Bp, Bp)                          # aligned group
        gates = (xg_sc[pl.ds(row, Bp), :]                         # (Bp, 4H) f32
                 + jnp.dot(h.astype(jnp.bfloat16), whh,
                           preferred_element_type=jnp.float32))
        # One full-vreg sigmoid; g lanes become tanh via 2*sigmoid(2x)-1.
        s = jax.nn.sigmoid(gates * pre)
        acts = s * pre + post_b
        # PyTorch gate order: [i, f, g, o]
        i_g = acts[:, 0 * H:1 * H]
        f_g = acts[:, 1 * H:2 * H]
        g_g = acts[:, 2 * H:3 * H]
        o_g = acts[:, 3 * H:4 * H]
        c_new = f_g * c + i_g * g_g
        h_new = o_g * jnp.tanh(c_new)
        hs_sc[pl.ds(row, Bp), :] = h_new                          # stash h_t (VMEM)
        return h_new, c_new

    zeros = jnp.zeros((Bp, H), jnp.float32)
    lax.fori_loop(0, T, step, (zeros, zeros), unroll=True)

    # ---- phase 3: Dropout(eval)=identity, LeakyReLU(0.1), lane-dense fc ----
    hs = hs_sc[...]                                               # (T*Bp, H)
    act = jnp.where(hs > 0, hs, 0.1 * hs)
    act_t = act.T                                                 # (H, T*Bp), XLU, off serial path
    out_ref[...] = (
        jnp.dot(wfc_ref[...], act_t, preferred_element_type=jnp.float32)
        + bfc_ref[0]                                              # scalar bias (SMEM)
    )


def lstm_single_forward(x, params):
    """x: (B, T, D) float32 -> (B, T, 1) float32 (batch_first, eval mode)."""
    B, T, D = x.shape
    H = params["w_hh"].shape[0] // 4
    Bp = max(8, ((B + 7) // 8) * 8)       # pad each timestep to full sublane groups

    # Time-major, batch padded to Bp rows per timestep: row = t*Bp + b.
    x_tm = jnp.transpose(x, (1, 0, 2))                            # (T, B, D)
    x_tm = jnp.pad(x_tm, ((0, 0), (0, Bp - B), (0, 0)))           # (T, Bp, D)
    x2d = x_tm.reshape(T * Bp, D)                                 # (T*Bp, D)

    wih_t = jnp.transpose(params["w_ih"], (1, 0)).astype(jnp.bfloat16)   # (D, 4H)
    whh_t = jnp.transpose(params["w_hh"], (1, 0)).astype(jnp.bfloat16)   # (H, 4H)
    b = (params["b_ih"] + params["b_hh"]).reshape(1, 4 * H).astype(jnp.float32)
    wfc_row = params["fc_w"].astype(jnp.float32)                  # (1, H)
    bfc = params["fc_b"].reshape(1).astype(jnp.float32)           # (1,) -> SMEM

    kernel = functools.partial(_lstm_kernel, seq_len=T, batch_pad=Bp, hidden_dim=H)

    out_row = pl.pallas_call(
        kernel,
        out_shape=jax.ShapeDtypeStruct((1, T * Bp), jnp.float32),
        in_specs=[
            pl.BlockSpec(memory_space=pltpu.MemorySpace.VMEM),    # x (all timesteps)
            pl.BlockSpec(memory_space=pltpu.MemorySpace.VMEM),    # W_ih^T (bf16)
            pl.BlockSpec(memory_space=pltpu.MemorySpace.VMEM),    # W_hh^T (bf16)
            pl.BlockSpec(memory_space=pltpu.MemorySpace.VMEM),    # b_ih + b_hh
            pl.BlockSpec(memory_space=pltpu.MemorySpace.VMEM),    # fc3 weight (1, H)
            pl.BlockSpec(memory_space=pltpu.MemorySpace.SMEM),    # fc3 bias (scalar)
        ],
        out_specs=pl.BlockSpec(memory_space=pltpu.MemorySpace.VMEM),
        scratch_shapes=[
            pltpu.VMEM((T * Bp, 4 * H), jnp.float32),             # precomputed x-proj
            pltpu.VMEM((T * Bp, H), jnp.float32),                 # h_t history
        ],
        compiler_params=pltpu.CompilerParams(
            vmem_limit_bytes=32 * 1024 * 1024),
    )(x2d, wih_t, whh_t, b, wfc_row, bfc)

    # column j = t*Bp + b  ->  (T, Bp) -> keep real batch rows -> (B, T, 1)
    out = out_row.reshape(T, Bp)[:, :B]                           # (T, B)
    return jnp.transpose(out, (1, 0))[..., None]                  # (B, T, 1)


def reference_forward(x, params):
    """Pure-JAX f32 reference matching torch.nn.LSTM semantics (eval mode)."""
    H = params["w_hh"].shape[0] // 4
    wih_t = params["w_ih"].T
    whh_t = params["w_hh"].T
    b = params["b_ih"] + params["b_hh"]

    def step(carry, x_t):
        h, c = carry
        gates = x_t @ wih_t + h @ whh_t + b
        i, f, g, o = jnp.split(gates, 4, axis=-1)
        i, f, o = jax.nn.sigmoid(i), jax.nn.sigmoid(f), jax.nn.sigmoid(o)
        g = jnp.tanh(g)
        c = f * c + i * g
        h = o * jnp.tanh(c)
        return (h, c), h

    B = x.shape[0]
    init = (jnp.zeros((B, H), jnp.float32), jnp.zeros((B, H), jnp.float32))
    _, hs = lax.scan(step, init, jnp.transpose(x, (1, 0, 2)))
    hs = jnp.transpose(hs, (1, 0, 2))                              # (B, T, H)
    act = jnp.where(hs > 0, hs, 0.1 * hs)
    return act @ params["fc_w"].T + params["fc_b"]


def init_params(key, input_dim, hidden_dim):
    """Deterministic init mimicking PyTorch's U(-1/sqrt(H), 1/sqrt(H))."""
    ks = jax.random.split(key, 6)
    bound = 1.0 / jnp.sqrt(hidden_dim)
    u = lambda k, shape: jax.random.uniform(k, shape, jnp.float32, -bound, bound)
    return {
        "w_ih": u(ks[0], (4 * hidden_dim, input_dim)),
        "w_hh": u(ks[1], (4 * hidden_dim, hidden_dim)),
        "b_ih": u(ks[2], (4 * hidden_dim,)),
        "b_hh": u(ks[3], (4 * hidden_dim,)),
        "fc_w": u(ks[4], (1, hidden_dim)),
        "fc_b": u(ks[5], (1,)),
    }


if __name__ == "__main__":
    B, T, D, H = 2, 8, 4, 32

    key = jax.random.PRNGKey(0)
    k_x, k_p = jax.random.split(key)
    x = jax.random.normal(k_x, (B, T, D), jnp.float32)
    params = init_params(k_p, D, H)

    out = jax.block_until_ready(lstm_single_forward(x, params))
    ref = jax.block_until_ready(reference_forward(x, params))

    assert out.shape == (B, T, 1), out.shape
    # Tolerance loosened for the bf16-operand matmuls (f32 accumulate, f32 state).
    max_err = float(jnp.max(jnp.abs(out - ref)))
    assert jnp.allclose(out, ref, atol=3e-2, rtol=3e-2), max_err

    print("KERNEL_OK")
</pallas_src>

<mosaic_0001>
module attributes {stable_mosaic.version = 11 : i64} {
  func.func @_lstm_kernel(%arg0: memref<64x4xf32, #tpu.memory_space<vmem>>, %arg1: memref<4x128xbf16, #tpu.memory_space<vmem>>, %arg2: memref<32x128xbf16, #tpu.memory_space<vmem>>, %arg3: memref<1x128xf32, #tpu.memory_space<vmem>>, %arg4: memref<1x32xf32, #tpu.memory_space<vmem>>, %arg5: memref<1xf32, #tpu.memory_space<smem>>, %arg6: memref<1x64xf32, #tpu.memory_space<vmem>>, %arg7: memref<64x128xf32, #tpu.memory_space<vmem>>, %arg8: memref<64x32xf32, #tpu.memory_space<vmem>>) attributes {dimension_semantics = [], scalar_prefetch = 0 : i64, scratch_operands = 2 : i64, tpu.core_type = #tpu.core_type<tc>} {
    %c0 = arith.constant 0 : index
    %c0_0 = arith.constant 0 : index
    %0 = vector.load %arg0[%c0, %c0_0] : memref<64x4xf32, #tpu.memory_space<vmem>>, vector<64x4xf32>
    %1 = arith.truncf %0 : vector<64x4xf32> to vector<64x4xbf16>
    %c0_1 = arith.constant 0 : index
    %c0_2 = arith.constant 0 : index
    %2 = vector.load %arg1[%c0_1, %c0_2] : memref<4x128xbf16, #tpu.memory_space<vmem>>, vector<4x128xbf16>
    %cst = arith.constant dense<0.000000e+00> : vector<64x128xf32>
    %3 = tpu.matmul %1, %2, %cst {dimension_numbers = #tpu.dot_dimension_numbers<[1], [0], [0], [1], [0, 0, 1, 1], [], []>} : vector<64x4xbf16>, vector<4x128xbf16>, vector<64x128xf32> -> vector<64x128xf32>
    %c0_3 = arith.constant 0 : index
    %c0_4 = arith.constant 0 : index
    %4 = vector.load %arg3[%c0_3, %c0_4] : memref<1x128xf32, #tpu.memory_space<vmem>>, vector<1x128xf32>
    %5 = vector.broadcast %4 : vector<1x128xf32> to vector<64x128xf32>
    %6 = arith.addf %3, %5 : vector<64x128xf32>
    %c0_5 = arith.constant 0 : index
    %c0_6 = arith.constant 0 : index
    %7 = vector.load %arg7[%c0_5, %c0_6] : memref<64x128xf32, #tpu.memory_space<vmem>>, vector<64x128xf32>
    tpu.vector_store %arg7[%c0_5, %c0_6], %6 {strides = array<i32>} : memref<64x128xf32, #tpu.memory_space<vmem>>, vector<64x128xf32>,
    %c0_7 = arith.constant 0 : index
    %c0_8 = arith.constant 0 : index
    %8 = vector.load %arg2[%c0_7, %c0_8] : memref<32x128xbf16, #tpu.memory_space<vmem>>, vector<32x128xbf16>
    %9 = tpu.iota {dimensions = array<i32: 1>} : vector<8x128xi32>
    %c64_i32 = arith.constant 64 : i32
    %10 = vector.broadcast %c64_i32 : i32 to vector<8x128xi32>
    %11 = arith.cmpi sge, %9, %10 : vector<8x128xi32>
    %c96_i32 = arith.constant 96 : i32
    %12 = vector.broadcast %c96_i32 : i32 to vector<8x128xi32>
    %13 = arith.cmpi slt, %9, %12 : vector<8x128xi32>
    %14 = arith.andi %11, %13 : vector<8x128xi1>
    %cst_9 = arith.constant 2.000000e+00 : f32
    %cst_10 = arith.constant 1.000000e+00 : f32
    %15 = vector.broadcast %cst_9 : f32 to vector<8x128xf32>
    %16 = vector.broadcast %cst_10 : f32 to vector<8x128xf32>
    %17 = arith.select %14, %15, %16 : vector<8x128xi1>, vector<8x128xf32>
    %cst_11 = arith.constant -1.000000e+00 : f32
    %cst_12 = arith.constant 0.000000e+00 : f32
    %18 = vector.broadcast %cst_11 : f32 to vector<8x128xf32>
    %19 = vector.broadcast %cst_12 : f32 to vector<8x128xf32>
    %20 = arith.select %14, %18, %19 : vector<8x128xi1>, vector<8x128xf32>
    %cst_13 = arith.constant 0.000000e+00 : f32
    %21 = vector.broadcast %cst_13 : f32 to vector<8x32xf32>
    %c0_i32 = arith.constant 0 : i32
    %c8_i32 = arith.constant 8 : i32
    %22 = arith.muli %c0_i32, %c8_i32 : i32
    %23 = tpu.assume_multiple %22, 8 : i32
    %24 = arith.index_cast %23 : i32 to index
    %c0_14 = arith.constant 0 : index
    %25 = vector.load %arg7[%24, %c0_14] : memref<64x128xf32, #tpu.memory_space<vmem>>, vector<8x128xf32>
    %26 = arith.truncf %21 : vector<8x32xf32> to vector<8x32xbf16>
    %cst_15 = arith.constant dense<0.000000e+00> : vector<8x128xf32>
    %27 = tpu.matmul %26, %8, %cst_15 {dimension_numbers = #tpu.dot_dimension_numbers<[1], [0], [0], [1], [0, 0, 1, 1], [], []>} : vector<8x32xbf16>, vector<32x128xbf16>, vector<8x128xf32> -> vector<8x128xf32>
    %28 = arith.addf %25, %27 : vector<8x128xf32>
    %29 = arith.mulf %28, %17 : vector<8x128xf32>
    %30 = arith.negf %29 : vector<8x128xf32>
    %31 = math.exp %30 : vector<8x128xf32>
    %cst_16 = arith.constant 1.000000e+00 : f32
    %32 = vector.broadcast %cst_16 : f32 to vector<8x128xf32>
    %33 = arith.addf %32, %31 : vector<8x128xf32>
    %34 = arith.divf %32, %33 : vector<8x128xf32>
    %35 = arith.mulf %34, %17 : vector<8x128xf32>
    %36 = arith.addf %35, %20 : vector<8x128xf32>
    %37 = vector.extract_strided_slice %36 {offsets = [0, 0], sizes = [8, 32], strides = [1, 1]} : vector<8x128xf32> to vector<8x32xf32>
    %38 = vector.extract_strided_slice %36 {offsets = [0, 32], sizes = [8, 32], strides = [1, 1]} : vector<8x128xf32> to vector<8x32xf32>
    %39 = vector.extract_strided_slice %36 {offsets = [0, 64], sizes = [8, 32], strides = [1, 1]} : vector<8x128xf32> to vector<8x32xf32>
    %40 = vector.extract_strided_slice %36 {offsets = [0, 96], sizes = [8, 32], strides = [1, 1]} : vector<8x128xf32> to vector<8x32xf32>
    %41 = arith.mulf %38, %21 : vector<8x32xf32>
    %42 = arith.mulf %37, %39 : vector<8x32xf32>
    %43 = arith.addf %41, %42 : vector<8x32xf32>
    %44 = math.tanh %43 : vector<8x32xf32>
    %45 = arith.mulf %40, %44 : vector<8x32xf32>
    %46 = arith.index_cast %23 : i32 to index
    %c0_17 = arith.constant 0 : index
    %47 = vector.load %arg8[%46, %c0_17] : memref<64x32xf32, #tpu.memory_space<vmem>>, vector<8x32xf32>
    tpu.vector_store %arg8[%46, %c0_17], %45 {strides = array<i32>} : memref<64x32xf32, #tpu.memory_space<vmem>>, vector<8x32xf32>,
    %c1_i32 = arith.constant 1 : i32
    %c8_i32_18 = arith.constant 8 : i32
    %48 = arith.muli %c1_i32, %c8_i32_18 : i32
    %49 = tpu.assume_multiple %48, 8 : i32
    %50 = arith.index_cast %49 : i32 to index
    %c0_19 = arith.constant 0 : index
    %51 = vector.load %arg7[%50, %c0_19] : memref<64x128xf32, #tpu.memory_space<vmem>>, vector<8x128xf32>
    %52 = arith.truncf %45 : vector<8x32xf32> to vector<8x32xbf16>
    %cst_20 = arith.constant dense<0.000000e+00> : vector<8x128xf32>
    %53 = tpu.matmul %52, %8, %cst_20 {dimension_numbers = #tpu.dot_dimension_numbers<[1], [0], [0], [1], [0, 0, 1, 1], [], []>} : vector<8x32xbf16>, vector<32x128xbf16>, vector<8x128xf32> -> vector<8x128xf32>
    %54 = arith.addf %51, %53 : vector<8x128xf32>
    %55 = arith.mulf %54, %17 : vector<8x128xf32>
    %56 = arith.negf %55 : vector<8x128xf32>
    %57 = math.exp %56 : vector<8x128xf32>
    %cst_21 = arith.constant 1.000000e+00 : f32
    %58 = vector.broadcast %cst_21 : f32 to vector<8x128xf32>
    %59 = arith.addf %58, %57 : vector<8x128xf32>
    %60 = arith.divf %58, %59 : vector<8x128xf32>
    %61 = arith.mulf %60, %17 : vector<8x128xf32>
    %62 = arith.addf %61, %20 : vector<8x128xf32>
    %63 = vector.extract_strided_slice %62 {offsets = [0, 0], sizes = [8, 32], strides = [1, 1]} : vector<8x128xf32> to vector<8x32xf32>
    %64 = vector.extract_strided_slice %62 {offsets = [0, 32], sizes = [8, 32], strides = [1, 1]} : vector<8x128xf32> to vector<8x32xf32>
    %65 = vector.extract_strided_slice %62 {offsets = [0, 64], sizes = [8, 32], strides = [1, 1]} : vector<8x128xf32> to vector<8x32xf32>
    %66 = vector.extract_strided_slice %62 {offsets = [0, 96], sizes = [8, 32], strides = [1, 1]} : vector<8x128xf32> to vector<8x32xf32>
    %67 = arith.mulf %64, %43 : vector<8x32xf32>
    %68 = arith.mulf %63, %65 : vector<8x32xf32>
    %69 = arith.addf %67, %68 : vector<8x32xf32>
    %70 = math.tanh %69 : vector<8x32xf32>
    %71 = arith.mulf %66, %70 : vector<8x32xf32>
    %72 = arith.index_cast %49 : i32 to index
    %c0_22 = arith.constant 0 : index
    %73 = vector.load %arg8[%72, %c0_22] : memref<64x32xf32, #tpu.memory_space<vmem>>, vector<8x32xf32>
    tpu.vector_store %arg8[%72, %c0_22], %71 {strides = array<i32>} : memref<64x32xf32, #tpu.memory_space<vmem>>, vector<8x32xf32>,
    %c2_i32 = arith.constant 2 : i32
    %c8_i32_23 = arith.constant 8 : i32
    %74 = arith.muli %c2_i32, %c8_i32_23 : i32
    %75 = tpu.assume_multiple %74, 8 : i32
    %76 = arith.index_cast %75 : i32 to index
    %c0_24 = arith.constant 0 : index
    %77 = vector.load %arg7[%76, %c0_24] : memref<64x128xf32, #tpu.memory_space<vmem>>, vector<8x128xf32>
    %78 = arith.truncf %71 : vector<8x32xf32> to vector<8x32xbf16>
    %cst_25 = arith.constant dense<0.000000e+00> : vector<8x128xf32>
    %79 = tpu.matmul %78, %8, %cst_25 {dimension_numbers = #tpu.dot_dimension_numbers<[1], [0], [0], [1], [0, 0, 1, 1], [], []>} : vector<8x32xbf16>, vector<32x128xbf16>, vector<8x128xf32> -> vector<8x128xf32>
    %80 = arith.addf %77, %79 : vector<8x128xf32>
    %81 = arith.mulf %80, %17 : vector<8x128xf32>
    %82 = arith.negf %81 : vector<8x128xf32>
    %83 = math.exp %82 : vector<8x128xf32>
    %cst_26 = arith.constant 1.000000e+00 : f32
    %84 = vector.broadcast %cst_26 : f32 to vector<8x128xf32>
    %85 = arith.addf %84, %83 : vector<8x128xf32>
    %86 = arith.divf %84, %85 : vector<8x128xf32>
    %87 = arith.mulf %86, %17 : vector<8x128xf32>
    %88 = arith.addf %87, %20 : vector<8x128xf32>
    %89 = vector.extract_strided_slice %88 {offsets = [0, 0], sizes = [8, 32], strides = [1, 1]} : vector<8x128xf32> to vector<8x32xf32>
    %90 = vector.extract_strided_slice %88 {offsets = [0, 32], sizes = [8, 32], strides = [1, 1]} : vector<8x128xf32> to vector<8x32xf32>
    %91 = vector.extract_strided_slice %88 {offsets = [0, 64], sizes = [8, 32], strides = [1, 1]} : vector<8x128xf32> to vector<8x32xf32>
    %92 = vector.extract_strided_slice %88 {offsets = [0, 96], sizes = [8, 32], strides = [1, 1]} : vector<8x128xf32> to vector<8x32xf32>
    %93 = arith.mulf %90, %69 : vector<8x32xf32>
    %94 = arith.mulf %89, %91 : vector<8x32xf32>
    %95 = arith.addf %93, %94 : vector<8x32xf32>
    %96 = math.tanh %95 : vector<8x32xf32>
    %97 = arith.mulf %92, %96 : vector<8x32xf32>
    %98 = arith.index_cast %75 : i32 to index
    %c0_27 = arith.constant 0 : index
    %99 = vector.load %arg8[%98, %c0_27] : memref<64x32xf32, #tpu.memory_space<vmem>>, vector<8x32xf32>
    tpu.vector_store %arg8[%98, %c0_27], %97 {strides = array<i32>} : memref<64x32xf32, #tpu.memory_space<vmem>>, vector<8x32xf32>,
    %c3_i32 = arith.constant 3 : i32
    %c8_i32_28 = arith.constant 8 : i32
    %100 = arith.muli %c3_i32, %c8_i32_28 : i32
    %101 = tpu.assume_multiple %100, 8 : i32
    %102 = arith.index_cast %101 : i32 to index
    %c0_29 = arith.constant 0 : index
    %103 = vector.load %arg7[%102, %c0_29] : memref<64x128xf32, #tpu.memory_space<vmem>>, vector<8x128xf32>
    %104 = arith.truncf %97 : vector<8x32xf32> to vector<8x32xbf16>
    %cst_30 = arith.constant dense<0.000000e+00> : vector<8x128xf32>
    %105 = tpu.matmul %104, %8, %cst_30 {dimension_numbers = #tpu.dot_dimension_numbers<[1], [0], [0], [1], [0, 0, 1, 1], [], []>} : vector<8x32xbf16>, vector<32x128xbf16>, vector<8x128xf32> -> vector<8x128xf32>
    %106 = arith.addf %103, %105 : vector<8x128xf32>
    %107 = arith.mulf %106, %17 : vector<8x128xf32>
    %108 = arith.negf %107 : vector<8x128xf32>
    %109 = math.exp %108 : vector<8x128xf32>
    %cst_31 = arith.constant 1.000000e+00 : f32
    %110 = vector.broadcast %cst_31 : f32 to vector<8x128xf32>
    %111 = arith.addf %110, %109 : vector<8x128xf32>
    %112 = arith.divf %110, %111 : vector<8x128xf32>
    %113 = arith.mulf %112, %17 : vector<8x128xf32>
    %114 = arith.addf %113, %20 : vector<8x128xf32>
    %115 = vector.extract_strided_slice %114 {offsets = [0, 0], sizes = [8, 32], strides = [1, 1]} : vector<8x128xf32> to vector<8x32xf32>
    %116 = vector.extract_strided_slice %114 {offsets = [0, 32], sizes = [8, 32], strides = [1, 1]} : vector<8x128xf32> to vector<8x32xf32>
    %117 = vector.extract_strided_slice %114 {offsets = [0, 64], sizes = [8, 32], strides = [1, 1]} : vector<8x128xf32> to vector<8x32xf32>
    %118 = vector.extract_strided_slice %114 {offsets = [0, 96], sizes = [8, 32], strides = [1, 1]} : vector<8x128xf32> to vector<8x32xf32>
    %119 = arith.mulf %116, %95 : vector<8x32xf32>
    %120 = arith.mulf %115, %117 : vector<8x32xf32>
    %121 = arith.addf %119, %120 : vector<8x32xf32>
    %122 = math.tanh %121 : vector<8x32xf32>
    %123 = arith.mulf %118, %122 : vector<8x32xf32>
    %124 = arith.index_cast %101 : i32 to index
    %c0_32 = arith.constant 0 : index
    %125 = vector.load %arg8[%124, %c0_32] : memref<64x32xf32, #tpu.memory_space<vmem>>, vector<8x32xf32>
    tpu.vector_store %arg8[%124, %c0_32], %123 {strides = array<i32>} : memref<64x32xf32, #tpu.memory_space<vmem>>, vector<8x32xf32>,
    %c4_i32 = arith.constant 4 : i32
    %c8_i32_33 = arith.constant 8 : i32
    %126 = arith.muli %c4_i32, %c8_i32_33 : i32
    %127 = tpu.assume_multiple %126, 8 : i32
    %128 = arith.index_cast %127 : i32 to index
    %c0_34 = arith.constant 0 : index
    %129 = vector.load %arg7[%128, %c0_34] : memref<64x128xf32, #tpu.memory_space<vmem>>, vector<8x128xf32>
    %130 = arith.truncf %123 : vector<8x32xf32> to vector<8x32xbf16>
    %cst_35 = arith.constant dense<0.000000e+00> : vector<8x128xf32>
    %131 = tpu.matmul %130, %8, %cst_35 {dimension_numbers = #tpu.dot_dimension_numbers<[1], [0], [0], [1], [0, 0, 1, 1], [], []>} : vector<8x32xbf16>, vector<32x128xbf16>, vector<8x128xf32> -> vector<8x128xf32>
    %132 = arith.addf %129, %131 : vector<8x128xf32>
    %133 = arith.mulf %132, %17 : vector<8x128xf32>
    %134 = arith.negf %133 : vector<8x128xf32>
    %135 = math.exp %134 : vector<8x128xf32>
    %cst_36 = arith.constant 1.000000e+00 : f32
    %136 = vector.broadcast %cst_36 : f32 to vector<8x128xf32>
    %137 = arith.addf %136, %135 : vector<8x128xf32>
    %138 = arith.divf %136, %137 : vector<8x128xf32>
    %139 = arith.mulf %138, %17 : vector<8x128xf32>
    %140 = arith.addf %139, %20 : vector<8x128xf32>
    %141 = vector.extract_strided_slice %140 {offsets = [0, 0], sizes = [8, 32], strides = [1, 1]} : vector<8x128xf32> to vector<8x32xf32>
    %142 = vector.extract_strided_slice %140 {offsets = [0, 32], sizes = [8, 32], strides = [1, 1]} : vector<8x128xf32> to vector<8x32xf32>
    %143 = vector.extract_strided_slice %140 {offsets = [0, 64], sizes = [8, 32], strides = [1, 1]} : vector<8x128xf32> to vector<8x32xf32>
    %144 = vector.extract_strided_slice %140 {offsets = [0, 96], sizes = [8, 32], strides = [1, 1]} : vector<8x128xf32> to vector<8x32xf32>
    %145 = arith.mulf %142, %121 : vector<8x32xf32>
    %146 = arith.mulf %141, %143 : vector<8x32xf32>
    %147 = arith.addf %145, %146 : vector<8x32xf32>
    %148 = math.tanh %147 : vector<8x32xf32>
    %149 = arith.mulf %144, %148 : vector<8x32xf32>
    %150 = arith.index_cast %127 : i32 to index
    %c0_37 = arith.constant 0 : index
    %151 = vector.load %arg8[%150, %c0_37] : memref<64x32xf32, #tpu.memory_space<vmem>>, vector<8x32xf32>
    tpu.vector_store %arg8[%150, %c0_37], %149 {strides = array<i32>} : memref<64x32xf32, #tpu.memory_space<vmem>>, vector<8x32xf32>,
    %c5_i32 = arith.constant 5 : i32
    %c8_i32_38 = arith.constant 8 : i32
    %152 = arith.muli %c5_i32, %c8_i32_38 : i32
    %153 = tpu.assume_multiple %152, 8 : i32
    %154 = arith.index_cast %153 : i32 to index
    %c0_39 = arith.constant 0 : index
    %155 = vector.load %arg7[%154, %c0_39] : memref<64x128xf32, #tpu.memory_space<vmem>>, vector<8x128xf32>
    %156 = arith.truncf %149 : vector<8x32xf32> to vector<8x32xbf16>
    %cst_40 = arith.constant dense<0.000000e+00> : vector<8x128xf32>
    %157 = tpu.matmul %156, %8, %cst_40 {dimension_numbers = #tpu.dot_dimension_numbers<[1], [0], [0], [1], [0, 0, 1, 1], [], []>} : vector<8x32xbf16>, vector<32x128xbf16>, vector<8x128xf32> -> vector<8x128xf32>
    %158 = arith.addf %155, %157 : vector<8x128xf32>
    %159 = arith.mulf %158, %17 : vector<8x128xf32>
    %160 = arith.negf %159 : vector<8x128xf32>
    %161 = math.exp %160 : vector<8x128xf32>
    %cst_41 = arith.constant 1.000000e+00 : f32
    %162 = vector.broadcast %cst_41 : f32 to vector<8x128xf32>
    %163 = arith.addf %162, %161 : vector<8x128xf32>
    %164 = arith.divf %162, %163 : vector<8x128xf32>
    %165 = arith.mulf %164, %17 : vector<8x128xf32>
    %166 = arith.addf %165, %20 : vector<8x128xf32>
    %167 = vector.extract_strided_slice %166 {offsets = [0, 0], sizes = [8, 32], strides = [1, 1]} : vector<8x128xf32> to vector<8x32xf32>
    %168 = vector.extract_strided_slice %166 {offsets = [0, 32], sizes = [8, 32], strides = [1, 1]} : vector<8x128xf32> to vector<8x32xf32>
    %169 = vector.extract_strided_slice %166 {offsets = [0, 64], sizes = [8, 32], strides = [1, 1]} : vector<8x128xf32> to vector<8x32xf32>
    %170 = vector.extract_strided_slice %166 {offsets = [0, 96], sizes = [8, 32], strides = [1, 1]} : vector<8x128xf32> to vector<8x32xf32>
    %171 = arith.mulf %168, %147 : vector<8x32xf32>
    %172 = arith.mulf %167, %169 : vector<8x32xf32>
    %173 = arith.addf %171, %172 : vector<8x32xf32>
    %174 = math.tanh %173 : vector<8x32xf32>
    %175 = arith.mulf %170, %174 : vector<8x32xf32>
    %176 = arith.index_cast %153 : i32 to index
    %c0_42 = arith.constant 0 : index
    %177 = vector.load %arg8[%176, %c0_42] : memref<64x32xf32, #tpu.memory_space<vmem>>, vector<8x32xf32>
    tpu.vector_store %arg8[%176, %c0_42], %175 {strides = array<i32>} : memref<64x32xf32, #tpu.memory_space<vmem>>, vector<8x32xf32>,
    %c6_i32 = arith.constant 6 : i32
    %c8_i32_43 = arith.constant 8 : i32
    %178 = arith.muli %c6_i32, %c8_i32_43 : i32
    %179 = tpu.assume_multiple %178, 8 : i32
    %180 = arith.index_cast %179 : i32 to index
    %c0_44 = arith.constant 0 : index
    %181 = vector.load %arg7[%180, %c0_44] : memref<64x128xf32, #tpu.memory_space<vmem>>, vector<8x128xf32>
    %182 = arith.truncf %175 : vector<8x32xf32> to vector<8x32xbf16>
    %cst_45 = arith.constant dense<0.000000e+00> : vector<8x128xf32>
    %183 = tpu.matmul %182, %8, %cst_45 {dimension_numbers = #tpu.dot_dimension_numbers<[1], [0], [0], [1], [0, 0, 1, 1], [], []>} : vector<8x32xbf16>, vector<32x128xbf16>, vector<8x128xf32> -> vector<8x128xf32>
    %184 = arith.addf %181, %183 : vector<8x128xf32>
    %185 = arith.mulf %184, %17 : vector<8x128xf32>
    %186 = arith.negf %185 : vector<8x128xf32>
    %187 = math.exp %186 : vector<8x128xf32>
    %cst_46 = arith.constant 1.000000e+00 : f32
    %188 = vector.broadcast %cst_46 : f32 to vector<8x128xf32>
    %189 = arith.addf %188, %187 : vector<8x128xf32>
    %190 = arith.divf %188, %189 : vector<8x128xf32>
    %191 = arith.mulf %190, %17 : vector<8x128xf32>
    %192 = arith.addf %191, %20 : vector<8x128xf32>
    %193 = vector.extract_strided_slice %192 {offsets = [0, 0], sizes = [8, 32], strides = [1, 1]} : vector<8x128xf32> to vector<8x32xf32>
    %194 = vector.extract_strided_slice %192 {offsets = [0, 32], sizes = [8, 32], strides = [1, 1]} : vector<8x128xf32> to vector<8x32xf32>
    %195 = vector.extract_strided_slice %192 {offsets = [0, 64], sizes = [8, 32], strides = [1, 1]} : vector<8x128xf32> to vector<8x32xf32>
    %196 = vector.extract_strided_slice %192 {offsets = [0, 96], sizes = [8, 32], strides = [1, 1]} : vector<8x128xf32> to vector<8x32xf32>
    %197 = arith.mulf %194, %173 : vector<8x32xf32>
    %198 = arith.mulf %193, %195 : vector<8x32xf32>
    %199 = arith.addf %197, %198 : vector<8x32xf32>
    %200 = math.tanh %199 : vector<8x32xf32>
    %201 = arith.mulf %196, %200 : vector<8x32xf32>
    %202 = arith.index_cast %179 : i32 to index
    %c0_47 = arith.constant 0 : index
    %203 = vector.load %arg8[%202, %c0_47] : memref<64x32xf32, #tpu.memory_space<vmem>>, vector<8x32xf32>
    tpu.vector_store %arg8[%202, %c0_47], %201 {strides = array<i32>} : memref<64x32xf32, #tpu.memory_space<vmem>>, vector<8x32xf32>,
    %c7_i32 = arith.constant 7 : i32
    %c8_i32_48 = arith.constant 8 : i32
    %204 = arith.muli %c7_i32, %c8_i32_48 : i32
    %205 = tpu.assume_multiple %204, 8 : i32
    %206 = arith.index_cast %205 : i32 to index
    %c0_49 = arith.constant 0 : index
    %207 = vector.load %arg7[%206, %c0_49] : memref<64x128xf32, #tpu.memory_space<vmem>>, vector<8x128xf32>
    %208 = arith.truncf %201 : vector<8x32xf32> to vector<8x32xbf16>
    %cst_50 = arith.constant dense<0.000000e+00> : vector<8x128xf32>
    %209 = tpu.matmul %208, %8, %cst_50 {dimension_numbers = #tpu.dot_dimension_numbers<[1], [0], [0], [1], [0, 0, 1, 1], [], []>} : vector<8x32xbf16>, vector<32x128xbf16>, vector<8x128xf32> -> vector<8x128xf32>
    %210 = arith.addf %207, %209 : vector<8x128xf32>
    %211 = arith.mulf %210, %17 : vector<8x128xf32>
    %212 = arith.negf %211 : vector<8x128xf32>
    %213 = math.exp %212 : vector<8x128xf32>
    %cst_51 = arith.constant 1.000000e+00 : f32
    %214 = vector.broadcast %cst_51 : f32 to vector<8x128xf32>
    %215 = arith.addf %214, %213 : vector<8x128xf32>
    %216 = arith.divf %214, %215 : vector<8x128xf32>
    %217 = arith.mulf %216, %17 : vector<8x128xf32>
    %218 = arith.addf %217, %20 : vector<8x128xf32>
    %219 = vector.extract_strided_slice %218 {offsets = [0, 0], sizes = [8, 32], strides = [1, 1]} : vector<8x128xf32> to vector<8x32xf32>
    %220 = vector.extract_strided_slice %218 {offsets = [0, 32], sizes = [8, 32], strides = [1, 1]} : vector<8x128xf32> to vector<8x32xf32>
    %221 = vector.extract_strided_slice %218 {offsets = [0, 64], sizes = [8, 32], strides = [1, 1]} : vector<8x128xf32> to vector<8x32xf32>
    %222 = vector.extract_strided_slice %218 {offsets = [0, 96], sizes = [8, 32], strides = [1, 1]} : vector<8x128xf32> to vector<8x32xf32>
    %223 = arith.mulf %220, %199 : vector<8x32xf32>
    %224 = arith.mulf %219, %221 : vector<8x32xf32>
    %225 = arith.addf %223, %224 : vector<8x32xf32>
    %226 = math.tanh %225 : vector<8x32xf32>
    %227 = arith.mulf %222, %226 : vector<8x32xf32>
    %228 = arith.index_cast %205 : i32 to index
    %c0_52 = arith.constant 0 : index
    %229 = vector.load %arg8[%228, %c0_52] : memref<64x32xf32, #tpu.memory_space<vmem>>, vector<8x32xf32>
    tpu.vector_store %arg8[%228, %c0_52], %227 {strides = array<i32>} : memref<64x32xf32, #tpu.memory_space<vmem>>, vector<8x32xf32>,
    %c8_i32_53 = arith.constant 8 : i32
    %c0_54 = arith.constant 0 : index
    %c0_55 = arith.constant 0 : index
    %230 = vector.load %arg8[%c0_54, %c0_55] : memref<64x32xf32, #tpu.memory_space<vmem>>, vector<64x32xf32>
    %cst_56 = arith.constant 0.000000e+00 : f32
    %231 = vector.broadcast %cst_56 : f32 to vector<64x32xf32>
    %232 = arith.cmpf ogt, %230, %231 : vector<64x32xf32>
    %cst_57 = arith.constant 1.000000e-01 : f32
    %233 = vector.broadcast %cst_57 : f32 to vector<64x32xf32>
    %234 = arith.mulf %233, %230 : vector<64x32xf32>
    %235 = arith.select %232, %230, %234 : vector<64x32xi1>, vector<64x32xf32>
    %236 = tpu.transpose %235, [1, 0] : vector<64x32xf32> -> vector<32x64xf32>
    %c0_58 = arith.constant 0 : index
    %c0_59 = arith.constant 0 : index
    %237 = vector.load %arg4[%c0_58, %c0_59] : memref<1x32xf32, #tpu.memory_space<vmem>>, vector<1x32xf32>
    %cst_60 = arith.constant dense<0.000000e+00> : vector<1x64xf32>
    %238 = tpu.matmul %237, %236, %cst_60 {dimension_numbers = #tpu.dot_dimension_numbers<[1], [0], [0], [1], [0, 0, 1, 1], [], []>} : vector<1x32xf32>, vector<32x64xf32>, vector<1x64xf32> -> vector<1x64xf32>
    %c0_61 = arith.constant 0 : index
    %239 = memref.load %arg5[%c0_61] : memref<1xf32, #tpu.memory_space<smem>>
    %240 = vector.broadcast %239 : f32 to vector<1x64xf32>
    %241 = arith.addf %238, %240 : vector<1x64xf32>
    %c0_62 = arith.constant 0 : index
    %c0_63 = arith.constant 0 : index
    %242 = vector.load %arg6[%c0_62, %c0_63] : memref<1x64xf32, #tpu.memory_space<vmem>>, vector<1x64xf32>
    tpu.vector_store %arg6[%c0_62, %c0_63], %241 {strides = array<i32>} : memref<1x64xf32, #tpu.memory_space<vmem>>, vector<1x64xf32>,
    return
  }
}

</mosaic_0001>

<llo_original>
// kernel: tpu_custom_call.1
$region0: #{tpu_custom_call.1}
  #allocation0 [shape = 'u32[]', space=smem, size = 0x4, offset = 0x4, fixed_abs, tag = 'smem constant byte address 0x4 - core index']
  #allocation1 [shape = 'u32[144,128]{1,0:T(1,128)}', space=vmem, size = 0x12000, scoped, tag = 'internal scratch']
  #allocation2 [shape = 'f32[64,128]{1,0:T(8,128)}', space=vmem, size = 0x8000, scoped, tag = 'scratch operand']
  #allocation3 [shape = 'f32[64,32]{1,0:T(8,128)}', space=vmem, size = 0x8000, scoped, tag = 'scratch operand']
  #allocation4 [shape = 'f32[1]{0:T(128)S(6)}', space=smem, size = 0x200, scoped, tag = 'scoped memory for tpu_custom_call.1']
  %s0 = inlined_call_operand.vmem [shape: f32[64,4], index: 0, kind: input, shape index: {}]
  %s1 = inlined_call_operand.vmem [shape: bf16[4,128], index: 1, kind: input, shape index: {}]
  %s2 = inlined_call_operand.vmem [shape: bf16[32,128], index: 2, kind: input, shape index: {}]
  %s3 = inlined_call_operand.vmem [shape: f32[1,128], index: 3, kind: input, shape index: {}]
  %s4 = inlined_call_operand.vmem [shape: f32[1,32], index: 4, kind: input, shape index: {}]
  %s5 = inlined_call_operand.<no memory space> [shape: f32[1], index: 5, kind: input, shape index: {}]
  %s6 = inlined_call_operand.hbm [shape: f32[1,64], index: 6, kind: output, shape index: {}]
  %s7 = sld [smem:[#allocation0]]
  $region34: #{tpu_custom_call.1} parent=0
    _
  %s9 = ssub.s32 1, %s7
  %s10 = scalar_select 0, %s9, %s7
  %11 = sst [smem:[#allocation4]] %s5
  $region1: #{tpu_custom_call.1} parent=0
    #allocation5 [shape = 'u8[512]{0}', space=vmem, size = 0x400, scoped, tag = 'output window, operand 0, single buffered']
    #allocation6 [shape = 's32[1]{0}', space=sflag, size = 0x4, scoped, tag = 'scoped memory for tpu_custom_call.1']
    %12 = vsyncpa [#allocation6], 0
    // Predicated region
    $region2: #{tpu_custom_call.1} parent=1 // pred_check
      _
    $region3: #{tpu_custom_call.1} parent=1 // pred_check_branch
      %14 = sbr.rel (0) target = $region5
    $region4: #{tpu_custom_call.1} parent=1 // pred_region
      _
    $region5: #{tpu_custom_call.1} parent=1 // pred_fallthru
      _
    // Predicated region
    $region6: #{tpu_custom_call.1} parent=1 // pred_check
      _
    $region7: #{tpu_custom_call.1} parent=1 // pred_check_branch
      %16 = sbr.rel (0) target = $region9
    $region8: #{tpu_custom_call.1} parent=1 // pred_region
      _
    $region9: #{tpu_custom_call.1} parent=1 // pred_fallthru
      _
    // Predicated region
    $region10: #{tpu_custom_call.1} parent=1 // pred_check
      _
    $region11: #{tpu_custom_call.1} parent=1 // pred_check_branch
      %18 = sbr.rel (0) target = $region13
    $region12: #{tpu_custom_call.1} parent=1 // pred_region
      _
    $region13: #{tpu_custom_call.1} parent=1 // pred_fallthru
      _
    // Predicated region
    $region14: #{tpu_custom_call.1} parent=1 // pred_check
      _
    $region15: #{tpu_custom_call.1} parent=1 // pred_check_branch
      %20 = sbr.rel (0) target = $region17
    $region16: #{tpu_custom_call.1} parent=1 // pred_region
      _
    $region17: #{tpu_custom_call.1} parent=1 // pred_fallthru
      _
    // Predicated region
    $region18: #{tpu_custom_call.1} parent=1 // pred_check
      _
    $region19: #{tpu_custom_call.1} parent=1 // pred_check_branch
      %22 = sbr.rel (0) target = $region21
    $region20: #{tpu_custom_call.1} parent=1 // pred_region
      _
    $region21: #{tpu_custom_call.1} parent=1 // pred_fallthru
      _
    // Predicated region
    $region22: #{tpu_custom_call.1} parent=1 // pred_check
      _
    $region23: #{tpu_custom_call.1} parent=1 // pred_check_branch
      %24 = sbr.rel (0) target = $region25
    $region24: #{tpu_custom_call.1} parent=1 // pred_region
      _
    $region25: #{tpu_custom_call.1} parent=1 // pred_fallthru
      _
    %v26 = vld [vmem:[%s0] sm:$0xff]
    %v27 = vld [vmem:[%s0 + $0x8] sm:$0xff]
    %v28 = vld [vmem:[%s0 + $0x10] sm:$0xff]
    %v29 = vld [vmem:[%s0 + $0x18] sm:$0xff]
    %v30 = vld [vmem:[%s0 + $0x20] sm:$0xff]
    %v31 = vld [vmem:[%s0 + $0x28] sm:$0xff]
    %v32 = vld [vmem:[%s0 + $0x30] sm:$0xff]
    %v33 = vld [vmem:[%s0 + $0x38] sm:$0xff]
    %v34 = vpack.c.bf16 %v27, %v26
    %v35 = vpack.c.bf16 %v29, %v28
    %v36 = vpack.c.bf16 %v31, %v30
    %v37 = vpack.c.bf16 %v33, %v32
    %v38 = vld [vmem:[%s1] sm:$0x3]
    %v39 = vld [vmem:[%s3] sm:$0x1]
    %v41 = vlaneseq
    %v42 = vshrl.u32 %v41, 7
    %v43 = vsub.s32 0, %v42
    %v44 = vrot.slane %v39, %v43
    %vm46 = vcmask 31744
    %v48 = vsel %vm46, %v34, 0
    %v51 = vsel %vm46, %v35, 0
    %v54 = vsel %vm46, %v36, 0
    %v57 = vsel %vm46, %v37, 0
    %vm59 = vcmask 1041408
    %v61 = vsel %vm59, %v38, 0
    %63 = vmatprep.subr.bf16.mxu0 0
    %64 = vmatpush1.bf16.msra.mxu0 0
    %65 = vmatprep.subr.bf16.mxu0 0
    %66 = vmatpush1.bf16.msra.mxu0 0
    %67 = vmatprep.subr.bf16.mxu0 0
    %68 = vmatpush1.bf16.msra.mxu0 0
    %69 = vmatprep.subr.bf16.mxu0 0
    %70 = vmatpush1.bf16.msra.mxu0 0
    %71 = vmatprep.subr.bf16.mxu0 0
    %72 = vmatpush1.bf16.msra.mxu0 0
    %73 = vmatprep.subr.bf16.mxu0 0
    %74 = vmatpush1.bf16.msra.mxu0 0
    %75 = vmatprep.subr.bf16.mxu0 0
    %76 = vmatpush1.bf16.msra.mxu0 0
    %77 = vmatprep.subr.bf16.mxu0 0
    %78 = vmatpush1.bf16.msra.mxu0 %v61
    %79 = vmatprep.subr.bf16.mxu0 0
    %80 = vmatpush2.bf16.msra.mxu0 0
    %81 = vmatprep.subr.bf16.mxu0 0
    %82 = vmatpush2.bf16.msra.mxu0 0
    %83 = vmatprep.subr.bf16.mxu0 0
    %84 = vmatpush2.bf16.msra.mxu0 0
    %85 = vmatprep.subr.bf16.mxu0 0
    %86 = vmatpush2.bf16.msra.mxu0 0
    %87 = vmatprep.subr.bf16.mxu0 0
    %88 = vmatpush2.bf16.msra.mxu0 0
    %89 = vmatprep.subr.bf16.mxu0 0
    %90 = vmatpush2.bf16.msra.mxu0 0
    %91 = vmatprep.subr.bf16.mxu0 0
    %92 = vmatpush2.bf16.msra.mxu0 0
    %93 = vmatprep.subr.bf16.mxu0 0
    %94 = vmatpush2.bf16.msra.mxu0 0
    %95 = vmatprep.mubr.bf16.mxu0 0
    %96 = vmatmul.mubr.bf16.gmra.mxu0 %v48
    %v97 = vpop.f32.mrf.mxu0
    %v98 = vadd.f32 %v44, %v97
    %v99 = vpop.f32.mrf.mxu0
    %v100 = vpop.f32.mrf.mxu0
    %v101 = vadd.f32 %v44, %v100
    %v102 = vpop.f32.mrf.mxu0
    %103 = vmatprep.mubr.bf16.mxu0 0
    %104 = vmatmul.mubr.bf16.gmra.mxu0 %v51
    %v105 = vpop.f32.mrf.mxu0
    %v106 = vadd.f32 %v44, %v105
    %v107 = vpop.f32.mrf.mxu0
    %v108 = vpop.f32.mrf.mxu0
    %v109 = vadd.f32 %v44, %v108
    %v110 = vpop.f32.mrf.mxu0
    %111 = vmatprep.mubr.bf16.mxu0 0
    %112 = vmatmul.mubr.bf16.gmra.mxu0 %v54
    %v113 = vpop.f32.mrf.mxu0
    %v114 = vadd.f32 %v44, %v113
    %v115 = vpop.f32.mrf.mxu0
    %v116 = vpop.f32.mrf.mxu0
    %v117 = vadd.f32 %v44, %v116
    %v118 = vpop.f32.mrf.mxu0
    %119 = vmatprep.mubr.bf16.mxu0 0
    %120 = vmatmul.mubr.bf16.gmra.mxu0 %v57
    %v121 = vpop.f32.mrf.mxu0
    %v122 = vadd.f32 %v44, %v121
    %v123 = vpop.f32.mrf.mxu0
    %v124 = vpop.f32.mrf.mxu0
    %v125 = vadd.f32 %v44, %v124
    %v126 = vpop.f32.mrf.mxu0
    %127 = vdwg.mxu0
    %128 = vst [vmem:[#allocation2] sm:$0xff] %v98
    %129 = vst [vmem:[#allocation2 + $0x8] sm:$0xff] %v101
    %130 = vst [vmem:[#allocation2 + $0x10] sm:$0xff] %v106
    %131 = vst [vmem:[#allocation2 + $0x18] sm:$0xff] %v109
    %132 = vst [vmem:[#allocation2 + $0x20] sm:$0xff] %v114
    %133 = vst [vmem:[#allocation2 + $0x28] sm:$0xff] %v117
    %134 = vst [vmem:[#allocation2 + $0x30] sm:$0xff] %v122
    %135 = vst [vmem:[#allocation2 + $0x38] sm:$0xff] %v125
    %v136 = vld [vmem:[%s2] sm:$0xf]
    %v137 = vld [vmem:[%s2 + $0x4] sm:$0xf]
    %v138 = vld [vmem:[%s2 + $0x8] sm:$0xf]
    %v139 = vld [vmem:[%s2 + $0xc] sm:$0xf]
    %v140 = vlaneseq
    %v141 = vand.u32 %v140, 127
    %vm142 = vcmp.ge.s32.totalorder %v141, 64
    %vm143 = vcmp.lt.s32.totalorder %v141, 96
    %vm144 = vmand %vm142, %vm143
    %v145 = vsel %vm144, 2.0, 1.0
    %v146 = vsel %vm144, -1.0, 0.0
    %v147 = vld [vmem:[#allocation2] sm:$0xff]
    %v152 = vunpack.c.l.b16 %v136
    %v153 = vunpack.c.l.b16 %v137
    %v154 = vunpack.c.l.b16 %v138
    %v155 = vunpack.c.l.b16 %v139
    %v156 = vpack.c.b16 %v153, %v152
    %v157 = vpack.c.b16 %v155, %v154
    %vm160 = vcmask 261120
    %v162 = vsel %vm160, 0, 0
    %164 = vmatprep.subr.bf16.mxu0 0
    %165 = vmatpush1.bf16.msra.mxu0 0
    %166 = vmatprep.subr.bf16.mxu0 0
    %167 = vmatpush1.bf16.msra.mxu0 0
    %168 = vmatprep.subr.bf16.mxu0 0
    %169 = vmatpush1.bf16.msra.mxu0 0
    %170 = vmatprep.subr.bf16.mxu0 0
    %171 = vmatpush1.bf16.msra.mxu0 0
    %172 = vmatprep.subr.bf16.mxu0 0
    %173 = vmatpush1.bf16.msra.mxu0 0
    %174 = vmatprep.subr.bf16.mxu0 0
    %175 = vmatpush1.bf16.msra.mxu0 0
    %176 = vmatprep.subr.bf16.mxu0 0
    %177 = vmatpush1.bf16.msra.mxu0 %v157
    %178 = vmatprep.subr.bf16.mxu0 0
    %179 = vmatpush1.bf16.msra.mxu0 %v156
    %180 = vmatprep.subr.bf16.mxu0 0
    %181 = vmatpush2.bf16.msra.mxu0 0
    %182 = vmatprep.subr.bf16.mxu0 0
    %183 = vmatpush2.bf16.msra.mxu0 0
    %184 = vmatprep.subr.bf16.mxu0 0
    %185 = vmatpush2.bf16.msra.mxu0 0
    %186 = vmatprep.subr.bf16.mxu0 0
    %187 = vmatpush2.bf16.msra.mxu0 0
    %188 = vmatprep.subr.bf16.mxu0 0
    %189 = vmatpush2.bf16.msra.mxu0 0
    %190 = vmatprep.subr.bf16.mxu0 0
    %191 = vmatpush2.bf16.msra.mxu0 0
    %192 = vmatprep.subr.bf16.mxu0 0
    %193 = vmatpush2.bf16.msra.mxu0 0
    %194 = vmatprep.subr.bf16.mxu0 0
    %195 = vmatpush2.bf16.msra.mxu0 0
    %196 = vmatprep.mubr.bf16.mxu0 0
    %197 = vmatmul.mubr.bf16.gmra.mxu0 %v162
    %v198 = vpop.f32.mrf.mxu0
    %v199 = vadd.f32 0.0, %v198
    %v200 = vpop.f32.mrf.mxu0
    %v201 = vpop.f32.mrf.mxu0
    %v202 = vpop.f32.mrf.mxu0
    %203 = vdwg.mxu0
    %v204 = vadd.f32 %v147, %v199
    %v205 = vmul.f32 %v204, %v145
    %v206 = vxor.u32 %v205, 2147483648
    %v207 = vmul.f32 %v206, 1.442695
    %v208 = vpow.pop %v207
    %v209 = vadd.f32 %v208, 1.0
    %v210 = vrcp.pop %v209
    %v211 = vmul.f32 1.0, %v210
    %v212 = vmul.f32 %v211, %v145
    %v213 = vadd.f32 %v212, %v146
    %v214 = vmul.f32 %v213, 0.0
    %216 = vrot.lane.b32.xlu0 %v213, 64
    %v217 = vpop.permute.xlu0 %216
    %v219 = vmul.f32 %v213, %v217
    %221 = vrot.lane.b32.xlu0 %v219, 32
    %v222 = vpop.permute.xlu0 %221
    %v224 = vadd.f32 %v214, %v222
    %v225 = vtanh.pop %v224
    %227 = vrot.lane.b32.xlu0 %v225, 64
    %v228 = vpop.permute.xlu0 %227
    %v230 = vmul.f32 %v213, %v228
    %232 = vrot.lane.b32.xlu0 %v230, 32
    %v233 = vpop.permute.xlu0 %232
    %235 = vst.msk [vmem:[#allocation3] sm:$0xff] %vm160, %v233
    %s236 = scalar_lea.vmem [#allocation2], 8
    %v237 = vld [vmem:[%s236] sm:$0xff]
    %v238 = vpack.c.bf16 %v230, %v230
    %240 = vrot.lane.b32.xlu0 %v238, 32
    %v241 = vpop.permute.xlu0 %240
    %v243 = vsel %vm160, %v241, 0
    %245 = vmatprep.subr.bf16.mxu0 0
    %246 = vmatpush1.bf16.msra.mxu0 0
    %247 = vmatprep.subr.bf16.mxu0 0
    %248 = vmatpush1.bf16.msra.mxu0 0
    %249 = vmatprep.subr.bf16.mxu0 0
    %250 = vmatpush1.bf16.msra.mxu0 0
    %251 = vmatprep.subr.bf16.mxu0 0
    %252 = vmatpush1.bf16.msra.mxu0 0
    %253 = vmatprep.subr.bf16.mxu0 0
    %254 = vmatpush1.bf16.msra.mxu0 0
    %255 = vmatprep.subr.bf16.mxu0 0
    %256 = vmatpush1.bf16.msra.mxu0 0
    %257 = vmatprep.subr.bf16.mxu0 0
    %258 = vmatpush1.bf16.msra.mxu0 %v157
    %259 = vmatprep.subr.bf16.mxu0 0
    %260 = vmatpush1.bf16.msra.mxu0 %v156
    %261 = vmatprep.subr.bf16.mxu0 0
    %262 = vmatpush2.bf16.msra.mxu0 0
    %263 = vmatprep.subr.bf16.mxu0 0
    %264 = vmatpush2.bf16.msra.mxu0 0
    %265 = vmatprep.subr.bf16.mxu0 0
    %266 = vmatpush2.bf16.msra.mxu0 0
    %267 = vmatprep.subr.bf16.mxu0 0
    %268 = vmatpush2.bf16.msra.mxu0 0
    %269 = vmatprep.subr.bf16.mxu0 0
    %270 = vmatpush2.bf16.msra.mxu0 0
    %271 = vmatprep.subr.bf16.mxu0 0
    %272 = vmatpush2.bf16.msra.mxu0 0
    %273 = vmatprep.subr.bf16.mxu0 0
    %274 = vmatpush2.bf16.msra.mxu0 0
    %275 = vmatprep.subr.bf16.mxu0 0
    %276 = vmatpush2.bf16.msra.mxu0 0
    %277 = vmatprep.mubr.bf16.mxu0 0
    %278 = vmatmul.mubr.bf16.gmra.mxu0 %v243
    %v279 = vpop.f32.mrf.mxu0
    %v280 = vadd.f32 0.0, %v279
    %v281 = vpop.f32.mrf.mxu0
    %v282 = vpop.f32.mrf.mxu0
    %v283 = vpop.f32.mrf.mxu0
    %284 = vdwg.mxu0
    %v285 = vadd.f32 %v237, %v280
    %v286 = vmul.f32 %v285, %v145
    %v287 = vxor.u32 %v286, 2147483648
    %v288 = vmul.f32 %v287, 1.442695
    %v289 = vpow.pop %v288
    %v290 = vadd.f32 %v289, 1.0
    %v291 = vrcp.pop %v290
    %v292 = vmul.f32 1.0, %v291
    %v293 = vmul.f32 %v292, %v145
    %v294 = vadd.f32 %v293, %v146
    %v295 = vmul.f32 %v294, %v224
    %297 = vrot.lane.b32.xlu0 %v294, 64
    %v298 = vpop.permute.xlu0 %297
    %v300 = vmul.f32 %v294, %v298
    %302 = vrot.lane.b32.xlu0 %v300, 32
    %v303 = vpop.permute.xlu0 %302
    %v305 = vadd.f32 %v295, %v303
    %v306 = vtanh.pop %v305
    %308 = vrot.lane.b32.xlu0 %v306, 64
    %v309 = vpop.permute.xlu0 %308
    %v311 = vmul.f32 %v294, %v309
    %313 = vrot.lane.b32.xlu0 %v311, 32
    %v314 = vpop.permute.xlu0 %313
    %s316 = scalar_lea.vmem [#allocation3], 8
    %317 = vst.msk [vmem:[%s316] sm:$0xff] %vm160, %v314
    %s318 = scalar_lea.vmem [#allocation2], 16
    %v319 = vld [vmem:[%s318] sm:$0xff]
    %v320 = vpack.c.bf16 %v311, %v311
    %322 = vrot.lane.b32.xlu0 %v320, 32
    %v323 = vpop.permute.xlu0 %322
    %v325 = vsel %vm160, %v323, 0
    %327 = vmatprep.subr.bf16.mxu0 0
    %328 = vmatpush1.bf16.msra.mxu0 0
    %329 = vmatprep.subr.bf16.mxu0 0
    %330 = vmatpush1.bf16.msra.mxu0 0
    %331 = vmatprep.subr.bf16.mxu0 0
    %332 = vmatpush1.bf16.msra.mxu0 0
    %333 = vmatprep.subr.bf16.mxu0 0
    %334 = vmatpush1.bf16.msra.mxu0 0
    %335 = vmatprep.subr.bf16.mxu0 0
    %336 = vmatpush1.bf16.msra.mxu0 0
    %337 = vmatprep.subr.bf16.mxu0 0
    %338 = vmatpush1.bf16.msra.mxu0 0
    %339 = vmatprep.subr.bf16.mxu0 0
    %340 = vmatpush1.bf16.msra.mxu0 %v157
    %341 = vmatprep.subr.bf16.mxu0 0
    %342 = vmatpush1.bf16.msra.mxu0 %v156
    %343 = vmatprep.subr.bf16.mxu0 0
    %344 = vmatpush2.bf16.msra.mxu0 0
    %345 = vmatprep.subr.bf16.mxu0 0
    %346 = vmatpush2.bf16.msra.mxu0 0
    %347 = vmatprep.subr.bf16.mxu0 0
    %348 = vmatpush2.bf16.msra.mxu0 0
    %349 = vmatprep.subr.bf16.mxu0 0
    %350 = vmatpush2.bf16.msra.mxu0 0
    %351 = vmatprep.subr.bf16.mxu0 0
    %352 = vmatpush2.bf16.msra.mxu0 0
    %353 = vmatprep.subr.bf16.mxu0 0
    %354 = vmatpush2.bf16.msra.mxu0 0
    %355 = vmatprep.subr.bf16.mxu0 0
    %356 = vmatpush2.bf16.msra.mxu0 0
    %357 = vmatprep.subr.bf16.mxu0 0
    %358 = vmatpush2.bf16.msra.mxu0 0
    %359 = vmatprep.mubr.bf16.mxu0 0
    %360 = vmatmul.mubr.bf16.gmra.mxu0 %v325
    %v361 = vpop.f32.mrf.mxu0
    %v362 = vadd.f32 0.0, %v361
    %v363 = vpop.f32.mrf.mxu0
    %v364 = vpop.f32.mrf.mxu0
    %v365 = vpop.f32.mrf.mxu0
    %366 = vdwg.mxu0
    %v367 = vadd.f32 %v319, %v362
    %v368 = vmul.f32 %v367, %v145
    %v369 = vxor.u32 %v368, 2147483648
    %v370 = vmul.f32 %v369, 1.442695
    %v371 = vpow.pop %v370
    %v372 = vadd.f32 %v371, 1.0
    %v373 = vrcp.pop %v372
    %v374 = vmul.f32 1.0, %v373
    %v375 = vmul.f32 %v374, %v145
    %v376 = vadd.f32 %v375, %v146
    %v377 = vmul.f32 %v376, %v305
    %379 = vrot.lane.b32.xlu0 %v376, 64
    %v380 = vpop.permute.xlu0 %379
    %v382 = vmul.f32 %v376, %v380
    %384 = vrot.lane.b32.xlu0 %v382, 32
    %v385 = vpop.permute.xlu0 %384
    %v387 = vadd.f32 %v377, %v385
    %v388 = vtanh.pop %v387
    %390 = vrot.lane.b32.xlu0 %v388, 64
    %v391 = vpop.permute.xlu0 %390
    %v393 = vmul.f32 %v376, %v391
    %395 = vrot.lane.b32.xlu0 %v393, 32
    %v396 = vpop.permute.xlu0 %395
    %s398 = scalar_lea.vmem [#allocation3], 16
    %399 = vst.msk [vmem:[%s398] sm:$0xff] %vm160, %v396
    %s400 = scalar_lea.vmem [#allocation2], 24
    %v401 = vld [vmem:[%s400] sm:$0xff]
    %v402 = vpack.c.bf16 %v393, %v393
    %404 = vrot.lane.b32.xlu0 %v402, 32
    %v405 = vpop.permute.xlu0 %404
    %v407 = vsel %vm160, %v405, 0
    %409 = vmatprep.subr.bf16.mxu0 0
    %410 = vmatpush1.bf16.msra.mxu0 0
    %411 = vmatprep.subr.bf16.mxu0 0
    %412 = vmatpush1.bf16.msra.mxu0 0
    %413 = vmatprep.subr.bf16.mxu0 0
    %414 = vmatpush1.bf16.msra.mxu0 0
    %415 = vmatprep.subr.bf16.mxu0 0
    %416 = vmatpush1.bf16.msra.mxu0 0
    %417 = vmatprep.subr.bf16.mxu0 0
    %418 = vmatpush1.bf16.msra.mxu0 0
    %419 = vmatprep.subr.bf16.mxu0 0
    %420 = vmatpush1.bf16.msra.mxu0 0
    %421 = vmatprep.subr.bf16.mxu0 0
    %422 = vmatpush1.bf16.msra.mxu0 %v157
    %423 = vmatprep.subr.bf16.mxu0 0
    %424 = vmatpush1.bf16.msra.mxu0 %v156
    %425 = vmatprep.subr.bf16.mxu0 0
    %426 = vmatpush2.bf16.msra.mxu0 0
    %427 = vmatprep.subr.bf16.mxu0 0
    %428 = vmatpush2.bf16.msra.mxu0 0
    %429 = vmatprep.subr.bf16.mxu0 0
    %430 = vmatpush2.bf16.msra.mxu0 0
    %431 = vmatprep.subr.bf16.mxu0 0
    %432 = vmatpush2.bf16.msra.mxu0 0
    %433 = vmatprep.subr.bf16.mxu0 0
    %434 = vmatpush2.bf16.msra.mxu0 0
    %435 = vmatprep.subr.bf16.mxu0 0
    %436 = vmatpush2.bf16.msra.mxu0 0
    %437 = vmatprep.subr.bf16.mxu0 0
    %438 = vmatpush2.bf16.msra.mxu0 0
    %439 = vmatprep.subr.bf16.mxu0 0
    %440 = vmatpush2.bf16.msra.mxu0 0
    %441 = vmatprep.mubr.bf16.mxu0 0
    %442 = vmatmul.mubr.bf16.gmra.mxu0 %v407
    %v443 = vpop.f32.mrf.mxu0
    %v444 = vadd.f32 0.0, %v443
    %v445 = vpop.f32.mrf.mxu0
    %v446 = vpop.f32.mrf.mxu0
    %v447 = vpop.f32.mrf.mxu0
    %448 = vdwg.mxu0
    %v449 = vadd.f32 %v401, %v444
    %v450 = vmul.f32 %v449, %v145
    %v451 = vxor.u32 %v450, 2147483648
    %v452 = vmul.f32 %v451, 1.442695
    %v453 = vpow.pop %v452
    %v454 = vadd.f32 %v453, 1.0
    %v455 = vrcp.pop %v454
    %v456 = vmul.f32 1.0, %v455
    %v457 = vmul.f32 %v456, %v145
    %v458 = vadd.f32 %v457, %v146
    %v459 = vmul.f32 %v458, %v387
    %461 = vrot.lane.b32.xlu0 %v458, 64
    %v462 = vpop.permute.xlu0 %461
    %v464 = vmul.f32 %v458, %v462
    %466 = vrot.lane.b32.xlu0 %v464, 32
    %v467 = vpop.permute.xlu0 %466
    %v469 = vadd.f32 %v459, %v467
    %v470 = vtanh.pop %v469
    %472 = vrot.lane.b32.xlu0 %v470, 64
    %v473 = vpop.permute.xlu0 %472
    %v475 = vmul.f32 %v458, %v473
    %477 = vrot.lane.b32.xlu0 %v475, 32
    %v478 = vpop.permute.xlu0 %477
    %s480 = scalar_lea.vmem [#allocation3], 24
    %481 = vst.msk [vmem:[%s480] sm:$0xff] %vm160, %v478
    %s482 = scalar_lea.vmem [#allocation2], 32
    %v483 = vld [vmem:[%s482] sm:$0xff]
    %v484 = vpack.c.bf16 %v475, %v475
    %486 = vrot.lane.b32.xlu0 %v484, 32
    %v487 = vpop.permute.xlu0 %486
    %v489 = vsel %vm160, %v487, 0
    %491 = vmatprep.subr.bf16.mxu0 0
    %492 = vmatpush1.bf16.msra.mxu0 0
    %493 = vmatprep.subr.bf16.mxu0 0
    %494 = vmatpush1.bf16.msra.mxu0 0
    %495 = vmatprep.subr.bf16.mxu0 0
    %496 = vmatpush1.bf16.msra.mxu0 0
    %497 = vmatprep.subr.bf16.mxu0 0
    %498 = vmatpush1.bf16.msra.mxu0 0
    %499 = vmatprep.subr.bf16.mxu0 0
    %500 = vmatpush1.bf16.msra.mxu0 0
    %501 = vmatprep.subr.bf16.mxu0 0
    %502 = vmatpush1.bf16.msra.mxu0 0
    %503 = vmatprep.subr.bf16.mxu0 0
    %504 = vmatpush1.bf16.msra.mxu0 %v157
    %505 = vmatprep.subr.bf16.mxu0 0
    %506 = vmatpush1.bf16.msra.mxu0 %v156
    %507 = vmatprep.subr.bf16.mxu0 0
    %508 = vmatpush2.bf16.msra.mxu0 0
    %509 = vmatprep.subr.bf16.mxu0 0
    %510 = vmatpush2.bf16.msra.mxu0 0
    %511 = vmatprep.subr.bf16.mxu0 0
    %512 = vmatpush2.bf16.msra.mxu0 0
    %513 = vmatprep.subr.bf16.mxu0 0
    %514 = vmatpush2.bf16.msra.mxu0 0
    %515 = vmatprep.subr.bf16.mxu0 0
    %516 = vmatpush2.bf16.msra.mxu0 0
    %517 = vmatprep.subr.bf16.mxu0 0
    %518 = vmatpush2.bf16.msra.mxu0 0
    %519 = vmatprep.subr.bf16.mxu0 0
    %520 = vmatpush2.bf16.msra.mxu0 0
    %521 = vmatprep.subr.bf16.mxu0 0
    %522 = vmatpush2.bf16.msra.mxu0 0
    %523 = vmatprep.mubr.bf16.mxu0 0
    %524 = vmatmul.mubr.bf16.gmra.mxu0 %v489
    %v525 = vpop.f32.mrf.mxu0
    %v526 = vadd.f32 0.0, %v525
    %v527 = vpop.f32.mrf.mxu0
    %v528 = vpop.f32.mrf.mxu0
    %v529 = vpop.f32.mrf.mxu0
    %530 = vdwg.mxu0
    %v531 = vadd.f32 %v483, %v526
    %v532 = vmul.f32 %v531, %v145
    %v533 = vxor.u32 %v532, 2147483648
    %v534 = vmul.f32 %v533, 1.442695
    %v535 = vpow.pop %v534
    %v536 = vadd.f32 %v535, 1.0
    %v537 = vrcp.pop %v536
    %v538 = vmul.f32 1.0, %v537
    %v539 = vmul.f32 %v538, %v145
    %v540 = vadd.f32 %v539, %v146
    %v541 = vmul.f32 %v540, %v469
    %543 = vrot.lane.b32.xlu0 %v540, 64
    %v544 = vpop.permute.xlu0 %543
    %v546 = vmul.f32 %v540, %v544
    %548 = vrot.lane.b32.xlu0 %v546, 32
    %v549 = vpop.permute.xlu0 %548
    %v551 = vadd.f32 %v541, %v549
    %v552 = vtanh.pop %v551
    %554 = vrot.lane.b32.xlu0 %v552, 64
    %v555 = vpop.permute.xlu0 %554
    %v557 = vmul.f32 %v540, %v555
    %559 = vrot.lane.b32.xlu0 %v557, 32
    %v560 = vpop.permute.xlu0 %559
    %s562 = scalar_lea.vmem [#allocation3], 32
    %563 = vst.msk [vmem:[%s562] sm:$0xff] %vm160, %v560
    %s564 = scalar_lea.vmem [#allocation2], 40
    %v565 = vld [vmem:[%s564] sm:$0xff]
    %v566 = vpack.c.bf16 %v557, %v557
    %568 = vrot.lane.b32.xlu0 %v566, 32
    %v569 = vpop.permute.xlu0 %568
    %v571 = vsel %vm160, %v569, 0
    %573 = vmatprep.subr.bf16.mxu0 0
    %574 = vmatpush1.bf16.msra.mxu0 0
    %575 = vmatprep.subr.bf16.mxu0 0
    %576 = vmatpush1.bf16.msra.mxu0 0
    %577 = vmatprep.subr.bf16.mxu0 0
    %578 = vmatpush1.bf16.msra.mxu0 0
    %579 = vmatprep.subr.bf16.mxu0 0
    %580 = vmatpush1.bf16.msra.mxu0 0
    %581 = vmatprep.subr.bf16.mxu0 0
    %582 = vmatpush1.bf16.msra.mxu0 0
    %583 = vmatprep.subr.bf16.mxu0 0
    %584 = vmatpush1.bf16.msra.mxu0 0
    %585 = vmatprep.subr.bf16.mxu0 0
    %586 = vmatpush1.bf16.msra.mxu0 %v157
    %587 = vmatprep.subr.bf16.mxu0 0
    %588 = vmatpush1.bf16.msra.mxu0 %v156
    %589 = vmatprep.subr.bf16.mxu0 0
    %590 = vmatpush2.bf16.msra.mxu0 0
    %591 = vmatprep.subr.bf16.mxu0 0
    %592 = vmatpush2.bf16.msra.mxu0 0
    %593 = vmatprep.subr.bf16.mxu0 0
    %594 = vmatpush2.bf16.msra.mxu0 0
    %595 = vmatprep.subr.bf16.mxu0 0
    %596 = vmatpush2.bf16.msra.mxu0 0
    %597 = vmatprep.subr.bf16.mxu0 0
    %598 = vmatpush2.bf16.msra.mxu0 0
    %599 = vmatprep.subr.bf16.mxu0 0
    %600 = vmatpush2.bf16.msra.mxu0 0
    %601 = vmatprep.subr.bf16.mxu0 0
    %602 = vmatpush2.bf16.msra.mxu0 0
    %603 = vmatprep.subr.bf16.mxu0 0
    %604 = vmatpush2.bf16.msra.mxu0 0
    %605 = vmatprep.mubr.bf16.mxu0 0
    %606 = vmatmul.mubr.bf16.gmra.mxu0 %v571
    %v607 = vpop.f32.mrf.mxu0
    %v608 = vadd.f32 0.0, %v607
    %v609 = vpop.f32.mrf.mxu0
    %v610 = vpop.f32.mrf.mxu0
    %v611 = vpop.f32.mrf.mxu0
    %612 = vdwg.mxu0
    %v613 = vadd.f32 %v565, %v608
    %v614 = vmul.f32 %v613, %v145
    %v615 = vxor.u32 %v614, 2147483648
    %v616 = vmul.f32 %v615, 1.442695
    %v617 = vpow.pop %v616
    %v618 = vadd.f32 %v617, 1.0
    %v619 = vrcp.pop %v618
    %v620 = vmul.f32 1.0, %v619
    %v621 = vmul.f32 %v620, %v145
    %v622 = vadd.f32 %v621, %v146
    %v623 = vmul.f32 %v622, %v551
    %625 = vrot.lane.b32.xlu0 %v622, 64
    %v626 = vpop.permute.xlu0 %625
    %v628 = vmul.f32 %v622, %v626
    %630 = vrot.lane.b32.xlu0 %v628, 32
    %v631 = vpop.permute.xlu0 %630
    %v633 = vadd.f32 %v623, %v631
    %v634 = vtanh.pop %v633
    %636 = vrot.lane.b32.xlu0 %v634, 64
    %v637 = vpop.permute.xlu0 %636
    %v639 = vmul.f32 %v622, %v637
    %641 = vrot.lane.b32.xlu0 %v639, 32
    %v642 = vpop.permute.xlu0 %641
    %s644 = scalar_lea.vmem [#allocation3], 40
    %645 = vst.msk [vmem:[%s644] sm:$0xff] %vm160, %v642
    %s646 = scalar_lea.vmem [#allocation2], 48
    %v647 = vld [vmem:[%s646] sm:$0xff]
    %v648 = vpack.c.bf16 %v639, %v639
    %650 = vrot.lane.b32.xlu0 %v648, 32
    %v651 = vpop.permute.xlu0 %650
    %v653 = vsel %vm160, %v651, 0
    %655 = vmatprep.subr.bf16.mxu0 0
    %656 = vmatpush1.bf16.msra.mxu0 0
    %657 = vmatprep.subr.bf16.mxu0 0
    %658 = vmatpush1.bf16.msra.mxu0 0
    %659 = vmatprep.subr.bf16.mxu0 0
    %660 = vmatpush1.bf16.msra.mxu0 0
    %661 = vmatprep.subr.bf16.mxu0 0
    %662 = vmatpush1.bf16.msra.mxu0 0
    %663 = vmatprep.subr.bf16.mxu0 0
    %664 = vmatpush1.bf16.msra.mxu0 0
    %665 = vmatprep.subr.bf16.mxu0 0
    %666 = vmatpush1.bf16.msra.mxu0 0
    %667 = vmatprep.subr.bf16.mxu0 0
    %668 = vmatpush1.bf16.msra.mxu0 %v157
    %669 = vmatprep.subr.bf16.mxu0 0
    %670 = vmatpush1.bf16.msra.mxu0 %v156
    %671 = vmatprep.subr.bf16.mxu0 0
    %672 = vmatpush2.bf16.msra.mxu0 0
    %673 = vmatprep.subr.bf16.mxu0 0
    %674 = vmatpush2.bf16.msra.mxu0 0
    %675 = vmatprep.subr.bf16.mxu0 0
    %676 = vmatpush2.bf16.msra.mxu0 0
    %677 = vmatprep.subr.bf16.mxu0 0
    %678 = vmatpush2.bf16.msra.mxu0 0
    %679 = vmatprep.subr.bf16.mxu0 0
    %680 = vmatpush2.bf16.msra.mxu0 0
    %681 = vmatprep.subr.bf16.mxu0 0
    %682 = vmatpush2.bf16.msra.mxu0 0
    %683 = vmatprep.subr.bf16.mxu0 0
    %684 = vmatpush2.bf16.msra.mxu0 0
    %685 = vmatprep.subr.bf16.mxu0 0
    %686 = vmatpush2.bf16.msra.mxu0 0
    %687 = vmatprep.mubr.bf16.mxu0 0
    %688 = vmatmul.mubr.bf16.gmra.mxu0 %v653
    %v689 = vpop.f32.mrf.mxu0
    %v690 = vadd.f32 0.0, %v689
    %v691 = vpop.f32.mrf.mxu0
    %v692 = vpop.f32.mrf.mxu0
    %v693 = vpop.f32.mrf.mxu0
    %694 = vdwg.mxu0
    %v695 = vadd.f32 %v647, %v690
    %v696 = vmul.f32 %v695, %v145
    %v697 = vxor.u32 %v696, 2147483648
    %v698 = vmul.f32 %v697, 1.442695
    %v699 = vpow.pop %v698
    %v700 = vadd.f32 %v699, 1.0
    %v701 = vrcp.pop %v700
    %v702 = vmul.f32 1.0, %v701
    %v703 = vmul.f32 %v702, %v145
    %v704 = vadd.f32 %v703, %v146
    %v705 = vmul.f32 %v704, %v633
    %707 = vrot.lane.b32.xlu0 %v704, 64
    %v708 = vpop.permute.xlu0 %707
    %v710 = vmul.f32 %v704, %v708
    %712 = vrot.lane.b32.xlu0 %v710, 32
    %v713 = vpop.permute.xlu0 %712
    %v715 = vadd.f32 %v705, %v713
    %v716 = vtanh.pop %v715
    %718 = vrot.lane.b32.xlu0 %v716, 64
    %v719 = vpop.permute.xlu0 %718
    %v721 = vmul.f32 %v704, %v719
    %723 = vrot.lane.b32.xlu0 %v721, 32
    %v724 = vpop.permute.xlu0 %723
    %s726 = scalar_lea.vmem [#allocation3], 48
    %727 = vst.msk [vmem:[%s726] sm:$0xff] %vm160, %v724
    %s728 = scalar_lea.vmem [#allocation2], 56
    %v729 = vld [vmem:[%s728] sm:$0xff]
    %v730 = vpack.c.bf16 %v721, %v721
    %732 = vrot.lane.b32.xlu0 %v730, 32
    %v733 = vpop.permute.xlu0 %732
    %v735 = vsel %vm160, %v733, 0
    %737 = vmatprep.subr.bf16.mxu0 0
    %738 = vmatpush1.bf16.msra.mxu0 0
    %739 = vmatprep.subr.bf16.mxu0 0
    %740 = vmatpush1.bf16.msra.mxu0 0
    %741 = vmatprep.subr.bf16.mxu0 0
    %742 = vmatpush1.bf16.msra.mxu0 0
    %743 = vmatprep.subr.bf16.mxu0 0
    %744 = vmatpush1.bf16.msra.mxu0 0
    %745 = vmatprep.subr.bf16.mxu0 0
    %746 = vmatpush1.bf16.msra.mxu0 0
    %747 = vmatprep.subr.bf16.mxu0 0
    %748 = vmatpush1.bf16.msra.mxu0 0
    %749 = vmatprep.subr.bf16.mxu0 0
    %750 = vmatpush1.bf16.msra.mxu0 %v157
    %751 = vmatprep.subr.bf16.mxu0 0
    %752 = vmatpush1.bf16.msra.mxu0 %v156
    %753 = vmatprep.subr.bf16.mxu0 0
    %754 = vmatpush2.bf16.msra.mxu0 0
    %755 = vmatprep.subr.bf16.mxu0 0
    %756 = vmatpush2.bf16.msra.mxu0 0
    %757 = vmatprep.subr.bf16.mxu0 0
    %758 = vmatpush2.bf16.msra.mxu0 0
    %759 = vmatprep.subr.bf16.mxu0 0
    %760 = vmatpush2.bf16.msra.mxu0 0
    %761 = vmatprep.subr.bf16.mxu0 0
    %762 = vmatpush2.bf16.msra.mxu0 0
    %763 = vmatprep.subr.bf16.mxu0 0
    %764 = vmatpush2.bf16.msra.mxu0 0
    %765 = vmatprep.subr.bf16.mxu0 0
    %766 = vmatpush2.bf16.msra.mxu0 0
    %767 = vmatprep.subr.bf16.mxu0 0
    %768 = vmatpush2.bf16.msra.mxu0 0
    %769 = vmatprep.mubr.bf16.mxu0 0
    %770 = vmatmul.mubr.bf16.gmra.mxu0 %v735
    %v771 = vpop.f32.mrf.mxu0
    %v772 = vadd.f32 0.0, %v771
    %v773 = vpop.f32.mrf.mxu0
    %v774 = vpop.f32.mrf.mxu0
    %v775 = vpop.f32.mrf.mxu0
    %776 = vdwg.mxu0
    %v777 = vadd.f32 %v729, %v772
    %v778 = vmul.f32 %v777, %v145
    %v779 = vxor.u32 %v778, 2147483648
    %v780 = vmul.f32 %v779, 1.442695
    %v781 = vpow.pop %v780
    %v782 = vadd.f32 %v781, 1.0
    %v783 = vrcp.pop %v782
    %v784 = vmul.f32 1.0, %v783
    %v785 = vmul.f32 %v784, %v145
    %v786 = vadd.f32 %v785, %v146
    %v787 = vmul.f32 %v786, %v715
    %789 = vrot.lane.b32.xlu0 %v786, 64
    %v790 = vpop.permute.xlu0 %789
    %v792 = vmul.f32 %v786, %v790
    %794 = vrot.lane.b32.xlu0 %v792, 32
    %v795 = vpop.permute.xlu0 %794
    %v797 = vadd.f32 %v787, %v795
    %v798 = vtanh.pop %v797
    %800 = vrot.lane.b32.xlu0 %v798, 64
    %v801 = vpop.permute.xlu0 %800
    %v803 = vmul.f32 %v786, %v801
    %805 = vrot.lane.b32.xlu0 %v803, 32
    %v806 = vpop.permute.xlu0 %805
    %s808 = scalar_lea.vmem [#allocation3], 56
    %809 = vst.msk [vmem:[%s808] sm:$0xff] %vm160, %v806
    %v810 = vld [vmem:[#allocation3] sm:$0xff]
    %v811 = vld [vmem:[#allocation3 + $0x8] sm:$0xff]
    %v812 = vld [vmem:[#allocation3 + $0x10] sm:$0xff]
    %v813 = vld [vmem:[#allocation3 + $0x18] sm:$0xff]
    %v814 = vld [vmem:[#allocation3 + $0x20] sm:$0xff]
    %v815 = vld [vmem:[#allocation3 + $0x28] sm:$0xff]
    %v816 = vld [vmem:[#allocation3 + $0x30] sm:$0xff]
    %v817 = vld [vmem:[#allocation3 + $0x38] sm:$0xff]
    %vm818 = vcmp.gt.f32.partialorder %v810, 0.0
    %vm819 = vcmp.gt.f32.partialorder %v811, 0.0
    %vm820 = vcmp.gt.f32.partialorder %v812, 0.0
    %vm821 = vcmp.gt.f32.partialorder %v813, 0.0
    %vm822 = vcmp.gt.f32.partialorder %v814, 0.0
    %vm823 = vcmp.gt.f32.partialorder %v815, 0.0
    %vm824 = vcmp.gt.f32.partialorder %v816, 0.0
    %vm825 = vcmp.gt.f32.partialorder %v817, 0.0
    %v826 = vmul.f32 %v810, 0.1
    %v827 = vmul.f32 %v811, 0.1
    %v828 = vmul.f32 %v812, 0.1
    %v829 = vmul.f32 %v813, 0.1
    %v830 = vmul.f32 %v814, 0.1
    %v831 = vmul.f32 %v815, 0.1
    %v832 = vmul.f32 %v816, 0.1
    %v833 = vmul.f32 %v817, 0.1
    %v834 = vsel %vm818, %v810, %v826
    %v835 = vsel %vm819, %v811, %v827
    %v836 = vsel %vm820, %v812, %v828
    %v837 = vsel %vm821, %v813, %v829
    %v838 = vsel %vm822, %v814, %v830
    %v839 = vsel %vm823, %v815, %v831
    %v840 = vsel %vm824, %v816, %v832
    %v841 = vsel %vm825, %v817, %v833
    %v842 = vld [vmem:[%s4] sm:$0x1]
    %s843 = sld [smem:[#allocation4]]
    %v844 = vstv %s843
    %v846 = vsel %vm160, %v842, 0
    %v849 = vsel %vm160, %v834, 0
    %v852 = vsel %vm160, %v835, 0
    %v855 = vsel %vm160, %v836, 0
    %v858 = vsel %vm160, %v837, 0
    %v861 = vsel %vm160, %v838, 0
    %v864 = vsel %vm160, %v839, 0
    %v867 = vsel %vm160, %v840, 0
    %v870 = vsel %vm160, %v841, 0
    %872 = vmatprep.subr.mxu0 0.0
    %873 = vmatpush1.xpose.msra.mxu0 0.0
    %874 = vmatprep.subr.mxu0 0.0
    %875 = vmatpush1.xpose.msra.mxu0 0.0
    %876 = vmatprep.subr.mxu0 0.0
    %877 = vmatpush1.xpose.msra.mxu0 0.0
    %878 = vmatprep.subr.mxu0 0.0
    %879 = vmatpush1.xpose.msra.mxu0 0.0
    %880 = vmatprep.subr.mxu0 0.0
    %881 = vmatpush1.xpose.msra.mxu0 0.0
    %882 = vmatprep.subr.mxu0 0.0
    %883 = vmatpush1.xpose.msra.mxu0 0.0
    %884 = vmatprep.subr.mxu0 0.0
    %885 = vmatpush1.xpose.msra.mxu0 0.0
    %886 = vmatprep.subr.mxu0 0.0
    %887 = vmatpush1.xpose.msra.mxu0 0.0
    %888 = vmatprep.subr.mxu0 0.0
    %889 = vmatpush1.xpose.msra.mxu0 %v870
    %890 = vmatprep.subr.mxu0 0.0
    %891 = vmatpush1.xpose.msra.mxu0 %v867
    %892 = vmatprep.subr.mxu0 0.0
    %893 = vmatpush1.xpose.msra.mxu0 %v864
    %894 = vmatprep.subr.mxu0 0.0
    %895 = vmatpush1.xpose.msra.mxu0 %v861
    %896 = vmatprep.subr.mxu0 0.0
    %897 = vmatpush1.xpose.msra.mxu0 %v858
    %898 = vmatprep.subr.mxu0 0.0
    %899 = vmatpush1.xpose.msra.mxu0 %v855
    %900 = vmatprep.subr.mxu0 0.0
    %901 = vmatpush1.xpose.msra.mxu0 %v852
    %902 = vmatprep.subr.mxu0 0.0
    %903 = vmatpush1.xpose.msra.mxu0 %v849
    %904 = vmatprep.subr.mxu0 0.0
    %905 = vmatpush2.xpose.msra.mxu0 0.0
    %906 = vmatprep.subr.mxu0 0.0
    %907 = vmatpush2.xpose.msra.mxu0 0.0
    %908 = vmatprep.subr.mxu0 0.0
    %909 = vmatpush2.xpose.msra.mxu0 0.0
    %910 = vmatprep.subr.mxu0 0.0
    %911 = vmatpush2.xpose.msra.mxu0 0.0
    %912 = vmatprep.subr.mxu0 0.0
    %913 = vmatpush2.xpose.msra.mxu0 0.0
    %914 = vmatprep.subr.mxu0 0.0
    %915 = vmatpush2.xpose.msra.mxu0 0.0
    %916 = vmatprep.subr.mxu0 0.0
    %917 = vmatpush2.xpose.msra.mxu0 0.0
    %918 = vmatprep.subr.mxu0 0.0
    %919 = vmatpush2.xpose.msra.mxu0 0.0
    %920 = vmatprep.subr.mxu0 0.0
    %921 = vmatpush2.xpose.msra.mxu0 0.0
    %922 = vmatprep.subr.mxu0 0.0
    %923 = vmatpush2.xpose.msra.mxu0 0.0
    %924 = vmatprep.subr.mxu0 0.0
    %925 = vmatpush2.xpose.msra.mxu0 0.0
    %926 = vmatprep.subr.mxu0 0.0
    %927 = vmatpush2.xpose.msra.mxu0 0.0
    %928 = vmatprep.subr.mxu0 0.0
    %929 = vmatpush2.xpose.msra.mxu0 0.0
    %930 = vmatprep.subr.mxu0 0.0
    %931 = vmatpush2.xpose.msra.mxu0 0.0
    %932 = vmatprep.subr.mxu0 0.0
    %933 = vmatpush2.xpose.msra.mxu0 0.0
    %934 = vmatprep.subr.mxu0 0.0
    %935 = vmatpush2.xpose.msra.mxu0 0.0
    %936 = vmatprep.mubr.f32.mxu0 0.0
    %937 = vmatmul.mubr.f32.gmra.mxu0 %v846
    %v938 = vpop.f32.mrf.mxu0
    %v939 = vadd.f32 %v844, %v938
    %v940 = vpop.f32.mrf.mxu0
    %941 = vdwg.mxu0
    %vm942 = vcmask 516096
    %943 = vst.msk [vmem:[#allocation5] sm:$0x1] %vm942, %v939
    // Predicated region
    $region26: #{tpu_custom_call.1} parent=1 // pred_check
      _
    $region27: #{tpu_custom_call.1} parent=1 // pred_check_branch
      %945 = sbr.rel (0) target = $region29
    $region28: #{tpu_custom_call.1} parent=1 // pred_region
      %s947 = ssub.s32 16, 16
      %948 = vsyncadd [#allocation6], %s947
      %s950 = sshll.u32 [#allocation5], 4
      %s951 = int_to_ptr.vmem [resolvable:$true] %s950
      %953 = dma.vmem_to_hbm [thread:$0]  %s951, 16, %s6, [#allocation6]
    $region29: #{tpu_custom_call.1} parent=1 // pred_fallthru
      _
    // Predicated region
    $region30: #{tpu_custom_call.1} parent=1 // pred_check
      _
    $region31: #{tpu_custom_call.1} parent=1 // pred_check_branch
      %955 = sbr.rel (0) target = $region33
    $region32: #{tpu_custom_call.1} parent=1 // pred_region
      %956 = dma.done [#allocation6], 16
    $region33: #{tpu_custom_call.1} parent=1 // pred_fallthru
      _
    %957 = vsyncpa [#allocation6], 1

</llo_original>
